<compile_context>
chip_gen: v5e
topology: v5e:2x2
jax: 0.10.0
libtpu: 0.0.40
codegen_flags: <defaults>
</compile_context>

<pallas_src>
import jax
import jax.numpy as jnp
from jax.experimental import pallas as pl
from jax.experimental.pallas import tpu as pltpu


def _round_up(x, m):
    return (x + m - 1) // m * m


# ------------------------------- kernels --------------------------------------

def _conv_mask_from_ref(pts_ref, wc_ref, bc_ref):
    """Conv1d(C, 1, kernel=1) on the VPU: mask[b,n] = sum_c w[c]*pts[b,c,n] + b.

    Reads one channel slice at a time (no full-block f32 copy is materialized).
    wc_ref: SMEM (1, C); bc_ref: SMEM (1, 1).
    """
    tb, C, n = pts_ref.shape
    mask = jnp.full((tb, n), bc_ref[0, 0], jnp.float32)
    # TODO(synk): if in_channel ever grows beyond ~16, replace this static unroll
    # with a lax.fori_loop(..., unroll=True) / axis-1 reduction to bound live ranges.
    for c in range(C):
        mask = mask + pts_ref[:, c, :].astype(jnp.float32) * wc_ref[0, c]
    return mask                                           # (TB, N) f32


def _scale_store(pts_ref, out_ref, scale):
    """out[:, c, :] = pts[:, c, :] * scale, streamed per channel."""
    C = pts_ref.shape[1]
    for c in range(C):
        out_ref[:, c, :] = (pts_ref[:, c, :].astype(jnp.float32) * scale
                            ).astype(out_ref.dtype)


def _se_kernel_norec(pts_ref, wc_ref, bc_ref, out_ref):
    scale = jax.nn.sigmoid(_conv_mask_from_ref(pts_ref, wc_ref, bc_ref))
    _scale_store(pts_ref, out_ref, scale)


def _se_kernel_rec(pts_ref, wc_ref, bc_ref, w1t_ref, b1_ref, w2t_ref, b2_ref,
                   out_ref):
    mask = _conv_mask_from_ref(pts_ref, wc_ref, bc_ref)    # (TB, N) f32
    mdt = w1t_ref.dtype                                    # bf16 (default) weights
    # fc1 -> ReLU -> fc2: bf16 operands on the MXU, f32 accumulation.
    h = jnp.dot(mask.astype(mdt), w1t_ref[...],
                preferred_element_type=jnp.float32) + b1_ref[...]   # (TB, NR)
    h = jnp.maximum(h, 0.0)
    m2 = jnp.dot(h.astype(mdt), w2t_ref[...],
                 preferred_element_type=jnp.float32) + b2_ref[...]  # (TB, N)
    scale = jax.nn.sigmoid(m2)
    _scale_store(pts_ref, out_ref, scale)


# -------------------------------- wrapper --------------------------------------

def pointnet_se(points, params, *, rec=False, matmul_dtype=jnp.bfloat16):
    """points: [B, C, N] float32.  params: dict of weights (see init_params)."""
    B, C, N = points.shape

    # --- generation-aware VMEM budgeting --------------------------------------
    try:
        vmem_cap = int(pltpu.get_tpu_info().vmem_capacity_bytes)
    except Exception:
        vmem_cap = 128 << 20                               # v5e/v6e default
    vmem_ceiling = vmem_cap * 3 // 4                       # ~48 MiB on v7x, ~96 MiB else
    slack = 4 << 20

    itemsize = jnp.dtype(points.dtype).itemsize
    sub = max(8 * 4 // itemsize, 8)                        # sublane packing (8 f32 / 16 bf16)
    c_pad = _round_up(C, sub)
    n_lane = _round_up(N, 128)
    # in + out block, double-buffered, with sublane padding accounted for.
    per_tb_bytes = 4 * c_pad * n_lane * itemsize

    # Conv scalars live in SMEM (no padded (8,128) VMEM tiles for a few scalars).
    conv_w = params["conv_w"].reshape(1, C).astype(jnp.float32)
    conv_b = params["conv_b"].reshape(1, 1).astype(jnp.float32)
    smem_spec = pl.BlockSpec(memory_space=pltpu.MemorySpace.SMEM)

    weight_bytes = 0
    if rec:
        NR = params["fc1_w"].shape[0]
        # Pre-transpose once on the host; store matmul weights in bf16 (MXU native).
        w1t = params["fc1_w"].T.astype(matmul_dtype)                 # (N, NR)
        b1 = params["fc1_b"].reshape(1, NR).astype(jnp.float32)
        w2t = params["fc2_w"].T.astype(matmul_dtype)                 # (NR, N)
        b2 = params["fc2_b"].reshape(1, N).astype(jnp.float32)
        w_item = jnp.dtype(matmul_dtype).itemsize
        w_sub = max(8 * 4 // w_item, 8)
        w_bytes_sb = ((_round_up(N, w_sub) * _round_up(NR, 128)
                       + _round_up(NR, w_sub) * _round_up(N, 128)) * w_item
                      + (_round_up(NR, 128) + _round_up(N, 128)) * 8 * 4)
        # Conservative: assume double-buffered weights (the Buffered(1) fallback case).
        weight_bytes = 2 * w_bytes_sb
        # TODO(synk): for very large n_points the fc weights should be K/N-tiled
        # (extra grid axis or pltpu.emit_pipeline) instead of monolithic VMEM blocks.

    # --- batch-tile selection ---------------------------------------------------
    pts_budget = max(vmem_ceiling - weight_bytes - slack, per_tb_bytes)
    TB = max(1, min(B, 512, pts_budget // per_tb_bytes))
    if vmem_cap <= (96 << 20) and B >= 2:
        # Small-VMEM parts (v7x) have 2 TensorCores/chip: keep >= 2 grid steps so the
        # "parallel" batch axis actually shards across both cores.
        TB = min(TB, pl.cdiv(B, 2))
    num_steps = pl.cdiv(B, TB)                             # ragged last block is masked
    vmem_limit = int(min(vmem_ceiling,
                         max(32 << 20, TB * per_tb_bytes + weight_bytes + slack)))

    pts_spec = pl.BlockSpec((TB, C, N), lambda i: (i, 0, 0))
    out_spec = pl.BlockSpec((TB, C, N), lambda i: (i, 0, 0))

    if rec:
        args = (points, conv_w, conv_b, w1t, b1, w2t, b2)
    else:
        args = (points, conv_w, conv_b)

    def _make_call(use_single_buffer):
        if rec:
            def wspec(shape):
                kw = {}
                if use_single_buffer:
                    # Grid-invariant blocks: single-buffer to halve weight VMEM.
                    kw["pipeline_mode"] = pl.Buffered(1)
                return pl.BlockSpec(shape, lambda i: (0,) * len(shape), **kw)
            kernel = _se_kernel_rec
            in_specs = [pts_spec, smem_spec, smem_spec,
                        wspec((N, NR)), wspec((1, NR)),
                        wspec((NR, N)), wspec((1, N))]
        else:
            kernel = _se_kernel_norec
            in_specs = [pts_spec, smem_spec, smem_spec]
        return pl.pallas_call(
            kernel,
            out_shape=jax.ShapeDtypeStruct((B, C, N), points.dtype),
            grid_spec=pltpu.PrefetchScalarGridSpec(
                num_scalar_prefetch=0,
                grid=(num_steps,),
                in_specs=in_specs,
                out_specs=out_spec,
            ),
            compiler_params=pltpu.CompilerParams(
                dimension_semantics=("parallel",),
                vmem_limit_bytes=vmem_limit),
        )

    if rec:
        try:
            out = _make_call(True)(*args)
            jax.block_until_ready(out)
            return out
        except Exception:
            # pipeline_mode=pl.Buffered(1) unsupported on this jax/libtpu:
            # fall back to the default (double-buffered) pipeline.
            return _make_call(False)(*args)
    return _make_call(False)(*args)


# ------------------------------ params / reference -----------------------------

def init_params(key, in_channel, n_points, rec=False, r=2):
    """Deterministic synthetic parameters matching the PyTorch module shapes."""
    keys = jax.random.split(key, 6)
    params = {
        # nn.Conv1d(in_channel, 1, 1): weight (1, C, 1) -> (1, C); bias (1,) -> (1, 1)
        "conv_w": jax.random.normal(keys[0], (1, in_channel), jnp.float32) * 0.1,
        "conv_b": jax.random.normal(keys[1], (1, 1), jnp.float32) * 0.1,
    }
    if rec:
        n_red = int(n_points / r)
        params.update({
            # nn.Linear(N, N_red): weight (N_red, N), bias (N_red,)
            "fc1_w": jax.random.normal(keys[2], (n_red, n_points), jnp.float32) * 0.1,
            "fc1_b": jax.random.normal(keys[3], (1, n_red), jnp.float32) * 0.1,
            # nn.Linear(N_red, N): weight (N, N_red), bias (N,)
            "fc2_w": jax.random.normal(keys[4], (n_points, n_red), jnp.float32) * 0.1,
            "fc2_b": jax.random.normal(keys[5], (1, n_points), jnp.float32) * 0.1,
        })
    return params


def _ref_forward(points, params, rec=False):
    """Pure-JAX reference mirroring the PyTorch forward (all f32)."""
    mask = jnp.einsum("oc,bcn->bon", params["conv_w"], points) + params["conv_b"][None]
    if rec:
        h = jnp.maximum(mask @ params["fc1_w"].T + params["fc1_b"][None], 0.0)
        mask = h @ params["fc2_w"].T + params["fc2_b"][None]
    mask = jax.nn.sigmoid(mask)            # (B, 1, N)
    return points * mask


if __name__ == "__main__":
    # Small shapes consistent with the module: B=2, C=4 (in_channel), N=16 (n_points), r=2.
    B, C, N, r = 2, 4, 16, 2
    key = jax.random.PRNGKey(0)
    k_pts, k_par = jax.random.split(key)
    points = jax.random.normal(k_pts, (B, C, N), jnp.float32)

    ok = True
    for rec in (False, True):
        params = init_params(k_par, C, N, rec=rec, r=r)
        out = jax.block_until_ready(pointnet_se(points, params, rec=rec))
        ref = _ref_forward(points, params, rec=rec)
        # rec path uses bf16 MXU operands (f32 accumulation) -> looser tolerance.
        tol = 1e-2 if rec else 2e-5
        if not jnp.allclose(out, ref, atol=tol, rtol=tol):
            ok = False

    if ok:
        print("KERNEL_OK")
</pallas_src>

<mosaic_0001>
module attributes {stable_mosaic.version = 11 : i64} {
  func.func @_se_kernel_norec(%arg0: i32, %arg1: memref<2x4x16xf32, #tpu.memory_space<vmem>>, %arg2: memref<1x4xf32, #tpu.memory_space<smem>>, %arg3: memref<1x1xf32, #tpu.memory_space<smem>>, %arg4: memref<2x4x16xf32, #tpu.memory_space<vmem>>) attributes {dimension_semantics = [#tpu.dimension_semantics<parallel>], iteration_bounds = array<i64: 1>, scalar_prefetch = 0 : i64, scratch_operands = 0 : i64, tpu.core_type = #tpu.core_type<tc>, window_params = [{transform_indices = @transform_0, window_bounds = array<i64: 2, 4, 16>}, {transform_indices = @transform_1, window_bounds = array<i64: 1, 4>}, {transform_indices = @transform_2, window_bounds = array<i64: 1, 1>}, {transform_indices = @transform_3, window_bounds = array<i64: 2, 4, 16>}]} {
    %c0 = arith.constant 0 : index
    %c0_0 = arith.constant 0 : index
    %0 = memref.load %arg3[%c0, %c0_0] : memref<1x1xf32, #tpu.memory_space<smem>>
    %1 = vector.broadcast %0 : f32 to vector<2x16xf32>
    %c0_1 = arith.constant 0 : index
    %c0_2 = arith.constant 0 : index
    %c0_3 = arith.constant 0 : index
    %2 = vector.load %arg1[%c0_1, %c0_2, %c0_3] : memref<2x4x16xf32, #tpu.memory_space<vmem>>, vector<2x1x16xf32>
    %3 = vector.shape_cast %2 : vector<2x1x16xf32> to vector<2x16xf32>
    %c0_4 = arith.constant 0 : index
    %c0_5 = arith.constant 0 : index
    %4 = memref.load %arg2[%c0_4, %c0_5] : memref<1x4xf32, #tpu.memory_space<smem>>
    %5 = vector.broadcast %4 : f32 to vector<2x16xf32>
    %6 = arith.mulf %3, %5 : vector<2x16xf32>
    %7 = arith.addf %1, %6 : vector<2x16xf32>
    %c0_6 = arith.constant 0 : index
    %c1 = arith.constant 1 : index
    %c0_7 = arith.constant 0 : index
    %8 = vector.load %arg1[%c0_6, %c1, %c0_7] : memref<2x4x16xf32, #tpu.memory_space<vmem>>, vector<2x1x16xf32>
    %9 = vector.shape_cast %8 : vector<2x1x16xf32> to vector<2x16xf32>
    %c0_8 = arith.constant 0 : index
    %c1_9 = arith.constant 1 : index
    %10 = memref.load %arg2[%c0_8, %c1_9] : memref<1x4xf32, #tpu.memory_space<smem>>
    %11 = vector.broadcast %10 : f32 to vector<2x16xf32>
    %12 = arith.mulf %9, %11 : vector<2x16xf32>
    %13 = arith.addf %7, %12 : vector<2x16xf32>
    %c0_10 = arith.constant 0 : index
    %c2 = arith.constant 2 : index
    %c0_11 = arith.constant 0 : index
    %14 = vector.load %arg1[%c0_10, %c2, %c0_11] : memref<2x4x16xf32, #tpu.memory_space<vmem>>, vector<2x1x16xf32>
    %15 = vector.shape_cast %14 : vector<2x1x16xf32> to vector<2x16xf32>
    %c0_12 = arith.constant 0 : index
    %c2_13 = arith.constant 2 : index
    %16 = memref.load %arg2[%c0_12, %c2_13] : memref<1x4xf32, #tpu.memory_space<smem>>
    %17 = vector.broadcast %16 : f32 to vector<2x16xf32>
    %18 = arith.mulf %15, %17 : vector<2x16xf32>
    %19 = arith.addf %13, %18 : vector<2x16xf32>
    %c0_14 = arith.constant 0 : index
    %c3 = arith.constant 3 : index
    %c0_15 = arith.constant 0 : index
    %20 = vector.load %arg1[%c0_14, %c3, %c0_15] : memref<2x4x16xf32, #tpu.memory_space<vmem>>, vector<2x1x16xf32>
    %21 = vector.shape_cast %20 : vector<2x1x16xf32> to vector<2x16xf32>
    %c0_16 = arith.constant 0 : index
    %c3_17 = arith.constant 3 : index
    %22 = memref.load %arg2[%c0_16, %c3_17] : memref<1x4xf32, #tpu.memory_space<smem>>
    %23 = vector.broadcast %22 : f32 to vector<2x16xf32>
    %24 = arith.mulf %21, %23 : vector<2x16xf32>
    %25 = arith.addf %19, %24 : vector<2x16xf32>
    %26 = arith.negf %25 : vector<2x16xf32>
    %27 = math.exp %26 : vector<2x16xf32>
    %cst = arith.constant 1.000000e+00 : f32
    %28 = vector.broadcast %cst : f32 to vector<2x16xf32>
    %29 = arith.addf %28, %27 : vector<2x16xf32>
    %30 = arith.divf %28, %29 : vector<2x16xf32>
    %c0_18 = arith.constant 0 : index
    %c0_19 = arith.constant 0 : index
    %c0_20 = arith.constant 0 : index
    %31 = vector.load %arg1[%c0_18, %c0_19, %c0_20] : memref<2x4x16xf32, #tpu.memory_space<vmem>>, vector<2x1x16xf32>
    %32 = vector.shape_cast %31 : vector<2x1x16xf32> to vector<2x16xf32>
    %33 = arith.mulf %32, %30 : vector<2x16xf32>
    %c0_21 = arith.constant 0 : index
    %c0_22 = arith.constant 0 : index
    %c0_23 = arith.constant 0 : index
    %34 = vector.load %arg4[%c0_21, %c0_22, %c0_23] : memref<2x4x16xf32, #tpu.memory_space<vmem>>, vector<2x1x16xf32>
    %35 = vector.shape_cast %34 : vector<2x1x16xf32> to vector<2x16xf32>
    %36 = vector.shape_cast %33 : vector<2x16xf32> to vector<2x1x16xf32>
    tpu.vector_store %arg4[%c0_21, %c0_22, %c0_23], %36 {strides = array<i32>} : memref<2x4x16xf32, #tpu.memory_space<vmem>>, vector<2x1x16xf32>,
    %c0_24 = arith.constant 0 : index
    %c1_25 = arith.constant 1 : index
    %c0_26 = arith.constant 0 : index
    %37 = vector.load %arg1[%c0_24, %c1_25, %c0_26] : memref<2x4x16xf32, #tpu.memory_space<vmem>>, vector<2x1x16xf32>
    %38 = vector.shape_cast %37 : vector<2x1x16xf32> to vector<2x16xf32>
    %39 = arith.mulf %38, %30 : vector<2x16xf32>
    %c0_27 = arith.constant 0 : index
    %c1_28 = arith.constant 1 : index
    %c0_29 = arith.constant 0 : index
    %40 = vector.load %arg4[%c0_27, %c1_28, %c0_29] : memref<2x4x16xf32, #tpu.memory_space<vmem>>, vector<2x1x16xf32>
    %41 = vector.shape_cast %40 : vector<2x1x16xf32> to vector<2x16xf32>
    %42 = vector.shape_cast %39 : vector<2x16xf32> to vector<2x1x16xf32>
    tpu.vector_store %arg4[%c0_27, %c1_28, %c0_29], %42 {strides = array<i32>} : memref<2x4x16xf32, #tpu.memory_space<vmem>>, vector<2x1x16xf32>,
    %c0_30 = arith.constant 0 : index
    %c2_31 = arith.constant 2 : index
    %c0_32 = arith.constant 0 : index
    %43 = vector.load %arg1[%c0_30, %c2_31, %c0_32] : memref<2x4x16xf32, #tpu.memory_space<vmem>>, vector<2x1x16xf32>
    %44 = vector.shape_cast %43 : vector<2x1x16xf32> to vector<2x16xf32>
    %45 = arith.mulf %44, %30 : vector<2x16xf32>
    %c0_33 = arith.constant 0 : index
    %c2_34 = arith.constant 2 : index
    %c0_35 = arith.constant 0 : index
    %46 = vector.load %arg4[%c0_33, %c2_34, %c0_35] : memref<2x4x16xf32, #tpu.memory_space<vmem>>, vector<2x1x16xf32>
    %47 = vector.shape_cast %46 : vector<2x1x16xf32> to vector<2x16xf32>
    %48 = vector.shape_cast %45 : vector<2x16xf32> to vector<2x1x16xf32>
    tpu.vector_store %arg4[%c0_33, %c2_34, %c0_35], %48 {strides = array<i32>} : memref<2x4x16xf32, #tpu.memory_space<vmem>>, vector<2x1x16xf32>,
    %c0_36 = arith.constant 0 : index
    %c3_37 = arith.constant 3 : index
    %c0_38 = arith.constant 0 : index
    %49 = vector.load %arg1[%c0_36, %c3_37, %c0_38] : memref<2x4x16xf32, #tpu.memory_space<vmem>>, vector<2x1x16xf32>
    %50 = vector.shape_cast %49 : vector<2x1x16xf32> to vector<2x16xf32>
    %51 = arith.mulf %50, %30 : vector<2x16xf32>
    %c0_39 = arith.constant 0 : index
    %c3_40 = arith.constant 3 : index
    %c0_41 = arith.constant 0 : index
    %52 = vector.load %arg4[%c0_39, %c3_40, %c0_41] : memref<2x4x16xf32, #tpu.memory_space<vmem>>, vector<2x1x16xf32>
    %53 = vector.shape_cast %52 : vector<2x1x16xf32> to vector<2x16xf32>
    %54 = vector.shape_cast %51 : vector<2x16xf32> to vector<2x1x16xf32>
    tpu.vector_store %arg4[%c0_39, %c3_40, %c0_41], %54 {strides = array<i32>} : memref<2x4x16xf32, #tpu.memory_space<vmem>>, vector<2x1x16xf32>,
    return
  }
  func.func @transform_0(%arg0: i32) -> (i32, i32, i32) {
    %c0_i32 = arith.constant 0 : i32
    %c0_i32_0 = arith.constant 0 : i32
    %c0_i32_1 = arith.constant 0 : i32
    return %arg0, %c0_i32, %c0_i32_0 : i32, i32, i32
  }
  func.func @transform_1(%arg0: i32) -> (i32, i32) {
    %c0_i32 = arith.constant 0 : i32
    %c0_i32_0 = arith.constant 0 : i32
    %c0_i32_1 = arith.constant 0 : i32
    return %c0_i32, %c0_i32_0 : i32, i32
  }
  func.func @transform_2(%arg0: i32) -> (i32, i32) {
    %c0_i32 = arith.constant 0 : i32
    %c0_i32_0 = arith.constant 0 : i32
    %c0_i32_1 = arith.constant 0 : i32
    return %c0_i32, %c0_i32_0 : i32, i32
  }
  func.func @transform_3(%arg0: i32) -> (i32, i32, i32) {
    %c0_i32 = arith.constant 0 : i32
    %c0_i32_0 = arith.constant 0 : i32
    %c0_i32_1 = arith.constant 0 : i32
    return %arg0, %c0_i32, %c0_i32_0 : i32, i32, i32
  }
}

</mosaic_0001>

<llo_original>
// kernel: tpu_custom_call.1
$region0: #{tpu_custom_call.1}
  #allocation0 [shape = 'u32[]', space=smem, size = 0x4, offset = 0x4, fixed_abs, tag = 'smem constant byte address 0x4 - core index']
  #allocation1 [shape = 'u32[72,128]{1,0:T(1,128)}', space=vmem, size = 0x9000, scoped, tag = 'internal scratch']
  #allocation2 [shape = 'f32[1,1]{1,0:T(1,128)S(6)}', space=smem, size = 0x200, scoped, tag = 'scoped memory for tpu_custom_call.1']
  %s0 = inlined_call_operand.hbm [shape: f32[2,4,16], index: 0, kind: input, shape index: {}]
  %s1 = inlined_call_operand.vmem [shape: f32[1,4], index: 1, kind: input, shape index: {}]
  %s2 = inlined_call_operand.<no memory space> [shape: f32[1,1], index: 2, kind: input, shape index: {}]
  %s3 = inlined_call_operand.hbm [shape: f32[2,4,16], index: 3, kind: output, shape index: {}]
  %s4 = sld [smem:[#allocation0]]
  $region30: #{tpu_custom_call.1} parent=0
    _
  %s6 = ssub.s32 1, %s4
  %s7 = scalar_select 0, %s6, %s4
  %8 = sst [smem:[#allocation2]] %s2
  $region1: #{tpu_custom_call.1} parent=0
    #allocation3 [shape = 'u8[4096]{0}', space=vmem, size = 0x1000, scoped, tag = 'input window, operand 0, single buffered']
    #allocation4 [shape = 's32[1]{0}', space=sflag, size = 0x4, scoped, tag = 'scoped memory for tpu_custom_call.1']
    #allocation5 [shape = 's32[1]{0}', space=sflag, size = 0x4, scoped, tag = 'scoped memory for tpu_custom_call.1']
    #allocation6 [shape = 's32[1]{0}', space=sflag, size = 0x4, scoped, tag = 'scoped memory for tpu_custom_call.1']
    #allocation7 [shape = 'u8[512]{0}', space=smem, size = 0x200, scoped, tag = 'input window, operand 1, single buffered']
    #allocation8 [shape = 'u8[4096]{0}', space=vmem, size = 0x1000, scoped, tag = 'output window, operand 0, single buffered']
    %9 = vsyncpa [#allocation4], 0
    %10 = vsyncpa [#allocation6], 0
    %11 = vsyncpa [#allocation5], 0
    // Predicated region
    $region2: #{tpu_custom_call.1} parent=1 // pred_check
      _
    $region3: #{tpu_custom_call.1} parent=1 // pred_check_branch
      %13 = sbr.rel (0) target = $region5
    $region4: #{tpu_custom_call.1} parent=1 // pred_region
      %15 = vsyncadd [#allocation4], 0
      %s16 = sshll.u32 %s0, 4
      %s17 = int_to_ptr.hbm [resolvable:$true] %s16
      %s18 = sshll.u32 [#allocation3], 4
      %s19 = int_to_ptr.vmem [resolvable:$true] %s18
      %24 = dma.hbm_to_vmem [thread:$0]  %s17, 128, %s19, [#allocation4], 64, 64, 4
    $region5: #{tpu_custom_call.1} parent=1 // pred_fallthru
      _
    // Predicated region
    $region6: #{tpu_custom_call.1} parent=1 // pred_check
      _
    $region7: #{tpu_custom_call.1} parent=1 // pred_check_branch
      %26 = sbr.rel (0) target = $region9
    $region8: #{tpu_custom_call.1} parent=1 // pred_region
      %28 = vsyncadd [#allocation6], 0
      %s30 = sshll.u32 %s1, 4
      %s31 = int_to_ptr.vmem [resolvable:$true] %s30
      %33 = dma.vmem_to_smem %s31, 16, [#allocation7], [#allocation6]
    $region9: #{tpu_custom_call.1} parent=1 // pred_fallthru
      _
    // Predicated region
    $region10: #{tpu_custom_call.1} parent=1 // pred_check
      _
    $region11: #{tpu_custom_call.1} parent=1 // pred_check_branch
      %35 = sbr.rel (0) target = $region13
    $region12: #{tpu_custom_call.1} parent=1 // pred_region
      _
    $region13: #{tpu_custom_call.1} parent=1 // pred_fallthru
      _
    // Predicated region
    $region14: #{tpu_custom_call.1} parent=1 // pred_check
      _
    $region15: #{tpu_custom_call.1} parent=1 // pred_check_branch
      %37 = sbr.rel (0) target = $region17
    $region16: #{tpu_custom_call.1} parent=1 // pred_region
      %39 = dma.done [#allocation4], 128
    $region17: #{tpu_custom_call.1} parent=1 // pred_fallthru
      _
    // Predicated region
    $region18: #{tpu_custom_call.1} parent=1 // pred_check
      _
    $region19: #{tpu_custom_call.1} parent=1 // pred_check_branch
      %41 = sbr.rel (0) target = $region21
    $region20: #{tpu_custom_call.1} parent=1 // pred_region
      %43 = dma.done [#allocation6], 16
    $region21: #{tpu_custom_call.1} parent=1 // pred_fallthru
      _
    %44 = sfence
    %s45 = sld [smem:[#allocation2]]
    %v46 = vstv %s45
    %v47 = vld [vmem:[#allocation3] sm:$0x1]
    %v48 = vld [vmem:[#allocation3 + $0x4] sm:$0x1]
    %s49 = sld [smem:[#allocation7]]
    %v50 = vstv %s49
    %v51 = vmul.f32 %v47, %v50
    %v52 = vmul.f32 %v48, %v50
    %v53 = vadd.f32 %v46, %v51
    %v54 = vadd.f32 %v46, %v52
    %v55 = vld [vmem:[#allocation3 + $0x1] sm:$0x1]
    %v56 = vld [vmem:[#allocation3 + $0x5] sm:$0x1]
    %s57 = sld [smem:[#allocation7 + $0x1]]
    %v58 = vstv %s57
    %v59 = vmul.f32 %v55, %v58
    %v60 = vmul.f32 %v56, %v58
    %v61 = vadd.f32 %v53, %v59
    %v62 = vadd.f32 %v54, %v60
    %v63 = vld [vmem:[#allocation3 + $0x2] sm:$0x1]
    %v64 = vld [vmem:[#allocation3 + $0x6] sm:$0x1]
    %s65 = sld [smem:[#allocation7 + $0x2]]
    %v66 = vstv %s65
    %v67 = vmul.f32 %v63, %v66
    %v68 = vmul.f32 %v64, %v66
    %v69 = vadd.f32 %v61, %v67
    %v70 = vadd.f32 %v62, %v68
    %v71 = vld [vmem:[#allocation3 + $0x3] sm:$0x1]
    %v72 = vld [vmem:[#allocation3 + $0x7] sm:$0x1]
    %s73 = sld [smem:[#allocation7 + $0x3]]
    %v74 = vstv %s73
    %v75 = vmul.f32 %v71, %v74
    %v76 = vmul.f32 %v72, %v74
    %v77 = vadd.f32 %v69, %v75
    %v78 = vadd.f32 %v70, %v76
    %v79 = vxor.u32 %v77, 2147483648
    %v80 = vxor.u32 %v78, 2147483648
    %v81 = vmul.f32 %v79, 1.442695
    %v82 = vpow.pop %v81
    %v83 = vmul.f32 %v80, 1.442695
    %v84 = vpow.pop %v83
    %v85 = vadd.f32 %v82, 1.0
    %v86 = vadd.f32 %v84, 1.0
    %v87 = vrcp.pop %v85
    %v88 = vmul.f32 %v85, %v87
    %v89 = vsub.f32 1.0, %v88
    %v90 = vmul.f32 %v87, %v89
    %v91 = vadd.f32 %v87, %v90
    %vm92 = vweird.f32 %v85
    %vm93 = vweird.f32 %v87
    %vm94 = vmor %vm92, %vm93
    %v95 = vsel %vm94, %v87, %v91
    %v96 = vand.u32 2147483647, %v85
    %vm97 = vcmp.eq.f32.partialorder %v96, 8.507059e+37
    %v98 = vand.u32 %v85, 2147483648
    %v99 = vor.u32 1.1754944e-38, %v98
    %v100 = vsel %vm97, %v99, %v95
    %v101 = vmul.f32 1.0, %v100
    %v102 = vrcp.pop %v86
    %v103 = vmul.f32 %v86, %v102
    %v104 = vsub.f32 1.0, %v103
    %v105 = vmul.f32 %v102, %v104
    %v106 = vadd.f32 %v102, %v105
    %vm107 = vweird.f32 %v86
    %vm108 = vweird.f32 %v102
    %vm109 = vmor %vm107, %vm108
    %v110 = vsel %vm109, %v102, %v106
    %v111 = vand.u32 2147483647, %v86
    %vm112 = vcmp.eq.f32.partialorder %v111, 8.507059e+37
    %v113 = vand.u32 %v86, 2147483648
    %v114 = vor.u32 1.1754944e-38, %v113
    %v115 = vsel %vm112, %v114, %v110
    %v116 = vmul.f32 1.0, %v115
    %v117 = vmul.f32 %v47, %v101
    %v118 = vmul.f32 %v48, %v116
    %vm119 = vcmask 122880
    %120 = vst.msk [vmem:[#allocation8] sm:$0x1] %vm119, %v117
    %121 = vst.msk [vmem:[#allocation8 + $0x4] sm:$0x1] %vm119, %v118
    %v122 = vld [vmem:[#allocation3 + $0x1] sm:$0x1]
    %v123 = vld [vmem:[#allocation3 + $0x5] sm:$0x1]
    %v124 = vmul.f32 %v122, %v101
    %v125 = vmul.f32 %v123, %v116
    %126 = vst.msk [vmem:[#allocation8 + $0x1] sm:$0x1] %vm119, %v124
    %127 = vst.msk [vmem:[#allocation8 + $0x5] sm:$0x1] %vm119, %v125
    %v128 = vld [vmem:[#allocation3 + $0x2] sm:$0x1]
    %v129 = vld [vmem:[#allocation3 + $0x6] sm:$0x1]
    %v130 = vmul.f32 %v128, %v101
    %v131 = vmul.f32 %v129, %v116
    %132 = vst.msk [vmem:[#allocation8 + $0x2] sm:$0x1] %vm119, %v130
    %133 = vst.msk [vmem:[#allocation8 + $0x6] sm:$0x1] %vm119, %v131
    %v134 = vld [vmem:[#allocation3 + $0x3] sm:$0x1]
    %v135 = vld [vmem:[#allocation3 + $0x7] sm:$0x1]
    %v136 = vmul.f32 %v134, %v101
    %v137 = vmul.f32 %v135, %v116
    %138 = vst.msk [vmem:[#allocation8 + $0x3] sm:$0x1] %vm119, %v136
    %139 = vst.msk [vmem:[#allocation8 + $0x7] sm:$0x1] %vm119, %v137
    // Predicated region
    $region22: #{tpu_custom_call.1} parent=1 // pred_check
      _
    $region23: #{tpu_custom_call.1} parent=1 // pred_check_branch
      %141 = sbr.rel (0) target = $region25
    $region24: #{tpu_custom_call.1} parent=1 // pred_region
      %143 = vsyncadd [#allocation5], 0
      %s144 = sshll.u32 [#allocation8], 4
      %s145 = int_to_ptr.vmem [resolvable:$true] %s144
      %s146 = sshll.u32 %s3, 4
      %s147 = int_to_ptr.hbm [resolvable:$true] %s146
      %152 = dma.vmem_to_hbm [thread:$0]  %s145, 128, %s147, [#allocation5], 64, 64, 4
    $region25: #{tpu_custom_call.1} parent=1 // pred_fallthru
      _
    // Predicated region
    $region26: #{tpu_custom_call.1} parent=1 // pred_check
      _
    $region27: #{tpu_custom_call.1} parent=1 // pred_check_branch
      %154 = sbr.rel (0) target = $region29
    $region28: #{tpu_custom_call.1} parent=1 // pred_region
      %156 = dma.done [#allocation5], 128
    $region29: #{tpu_custom_call.1} parent=1 // pred_fallthru
      _
    %157 = vsyncpa [#allocation4], 1
    %158 = vsyncpa [#allocation5], 1
    %159 = vsyncpa [#allocation6], 1

</llo_original>
